<compile_context>
chip_gen: v5e
topology: v5e:2x2
jax: 0.10.0
libtpu: 0.0.40
codegen_flags: <defaults>
</compile_context>

<pallas_src>
import jax
import jax.numpy as jnp
from jax.experimental import pallas as pl
from jax.experimental.pallas import tpu as pltpu


_LANES = 128
_OUT_SUBLANES = 8          # f32 output / accumulator block sublanes
_MAX_TILE_B = 2048         # per-step overhead already amortized ~512-1024 rows
_MIN_SPLIT_TILE_B = 512    # don't shrink per-partition tiles below this
_VMEM_FRACTION = 0.55      # fraction of physical VMEM for the resident working set


def _min_sublane(dtype) -> int:
    """Minimum second-to-last block-dim multiple for a packed dtype."""
    itemsize = jnp.dtype(dtype).itemsize
    return 8 * max(1, 4 // max(1, itemsize))   # f32->8, bf16->16, int8/fp8->32


def _vmem_capacity_bytes() -> int:
    """Physical VMEM of the current TPU generation (conservative fallback)."""
    try:
        cap = getattr(pltpu.get_tpu_info(), "vmem_capacity_bytes", None)
        if cap:
            return int(cap)
    except Exception:
        pass
    return 64 * 1024 * 1024   # v7x per-TC VMEM; safe lower bound everywhere


def _xent_kernel(x_ref, t_ref, out_ref, acc_ref):
    """grid = (n_parts ["parallel"], n_steps ["arbitrary"]).

    x_ref, t_ref : (tile_b, C) blocks of input / target.
    out_ref      : (8, 128) f32 per-partition block (partition total, replicated).
    acc_ref      : (8, 128) f32 VMEM scratch; lane-dense running partial sum
                   (every element carries the same scalar).
    """
    step = pl.program_id(1)

    @pl.when(step == 0)
    def _():
        acc_ref[...] = jnp.zeros_like(acc_ref)

    x = x_ref[...]            # (tile_b, C), native dtype
    t = t_ref[...]            # (tile_b, C), native dtype

    # Fused per-row loss:
    #   sum_c -t_c * log_softmax(x)_c = lse(x) * sum_c(t_c) - sum_c(t_c * x_c)
    # Row max and t*x in the input dtype; exp/log path and reductions in f32.
    m = jnp.max(x, axis=1, keepdims=True)                            # (tile_b, 1)
    e = jnp.exp((x - m).astype(jnp.float32))                         # (tile_b, C) f32
    lse = m.astype(jnp.float32) + jnp.log(
        jnp.sum(e, axis=1, keepdims=True))                           # (tile_b, 1)
    t_sum = jnp.sum(t, axis=1, keepdims=True, dtype=jnp.float32)     # (tile_b, 1)
    tx = jnp.sum(t * x, axis=1, keepdims=True, dtype=jnp.float32)    # (tile_b, 1)

    # Fold the per-row partials into a single scalar and broadcast-add it into
    # the tiny lane-dense accumulator (one vreg-sized update per step).
    acc_ref[...] += jnp.sum(lse * t_sum - tx)

    @pl.when(step == pl.num_programs(1) - 1)
    def _():
        out_ref[...] = acc_ref[...]     # one unmasked lane-dense store per partition


def softmax_cross_entropy_loss(x, target, *, tile_b=None, n_parts=2,
                               min_split_rows=_MIN_SPLIT_TILE_B):
    """x, target: (B, C) arrays of identical shape. Returns the scalar loss."""
    if x.shape != target.shape:
        raise ValueError(
            "Target size ({}) must be the same as input size ({})".format(
                target.shape, x.shape))
    B, C = x.shape
    sx = jnp.dtype(x.dtype).itemsize
    st = jnp.dtype(target.dtype).itemsize
    sub = max(_min_sublane(x.dtype), _min_sublane(target.dtype))

    cap = _vmem_capacity_bytes()
    # Resident bytes per batch row:
    #   double-buffered x & t input blocks (HBM dtype)              -> 2*(sx+st)*C
    #   ~3 f32-sized elementwise temporaries (cast / exp / product) -> 12*C
    #   lane-padded column temporaries (m, s, lse, t_sum, tx, row)  -> 6*128*4
    bytes_per_row = C * (2 * (sx + st) + 12) + 6 * _LANES * 4
    budget = max(1 << 20, int(_VMEM_FRACTION * cap) - (1 << 20))
    fit_rows = max(sub, budget // bytes_per_row)

    if tile_b is None:
        tile_b = min(_MAX_TILE_B, fit_rows)
    tile_b = max(1, min(int(tile_b), B))

    min_split = max(sub, int(min_split_rows))
    want_parts = max(1, int(n_parts))
    # Keep multiple partitions only when each gets a useful chunk of rows
    # (keeps both v7x TensorCores streaming; harmless on v5e/v6e).
    n_parts_eff = want_parts if (want_parts > 1 and B >= want_parts * min_split) else 1

    if n_parts_eff == 1 and tile_b >= B:
        # Single-block fast path: block shape equals the full array.
        tile_b = B
        n_steps = 1
        xp, tp = x, target
    else:
        if n_parts_eff > 1:
            # Ensure every partition has at least one tile of work.
            tile_b = min(tile_b, pl.cdiv(B, n_parts_eff))
        # Dtype-aware sublane rounding (f32 -> 8, bf16 -> 16, int8/fp8 -> 32).
        tile_b = max(sub, (tile_b // sub) * sub)
        n_tiles = pl.cdiv(B, tile_b)
        n_steps = pl.cdiv(n_tiles, n_parts_eff)
        padded_B = n_parts_eff * n_steps * tile_b
        if padded_B != B:
            # Zero-padded rows (x=0, t=0) contribute exactly 0 to the loss.
            pad = padded_B - B
            xp = jnp.pad(x, ((0, pad), (0, 0)))
            tp = jnp.pad(target, ((0, pad), (0, 0)))
        else:
            xp, tp = x, target

    out = pl.pallas_call(
        _xent_kernel,
        out_shape=jax.ShapeDtypeStruct(
            (n_parts_eff * _OUT_SUBLANES, _LANES), jnp.float32),
        grid_spec=pltpu.PrefetchScalarGridSpec(
            num_scalar_prefetch=0,
            grid=(n_parts_eff, n_steps),
            in_specs=[
                pl.BlockSpec((tile_b, C), lambda p, i: (p * n_steps + i, 0)),
                pl.BlockSpec((tile_b, C), lambda p, i: (p * n_steps + i, 0)),
            ],
            out_specs=pl.BlockSpec((_OUT_SUBLANES, _LANES),
                                   lambda p, i: (p, 0)),
            scratch_shapes=[pltpu.VMEM((_OUT_SUBLANES, _LANES), jnp.float32)],
        ),
        compiler_params=pltpu.CompilerParams(
            dimension_semantics=("parallel", "arbitrary"),
            vmem_limit_bytes=int(0.7 * cap),
        ),
    )(xp, tp)

    # Each (8, 128) partition block holds its partition total, replicated.
    partials = out.reshape(n_parts_eff, _OUT_SUBLANES, _LANES)[:, 0, 0]
    return jnp.sum(partials)


def _reference(x, target):
    return jnp.sum(-target * jax.nn.log_softmax(x, axis=1))


if __name__ == "__main__":
    key = jax.random.PRNGKey(0)
    k1, k2, k3, k4, k5, k6 = jax.random.split(key, 6)

    # 1) Small single-block fast path (batch=16, classes=32).
    B, C = 16, 32
    x = jax.random.normal(k1, (B, C), dtype=jnp.float32)
    t = jax.nn.softmax(jax.random.normal(k2, (B, C), dtype=jnp.float32), axis=1)
    loss = jax.block_until_ready(softmax_cross_entropy_loss(x, t))
    ref = _reference(x, t)
    assert jnp.allclose(loss, ref, rtol=1e-4, atol=1e-3), (loss, ref)

    # 2) Tiled + zero-padded + 2-partition path (forced small tiles).
    B2, C2 = 44, 32
    x2 = jax.random.normal(k3, (B2, C2), dtype=jnp.float32)
    t2 = jax.nn.softmax(jax.random.normal(k4, (B2, C2), dtype=jnp.float32),
                        axis=1)
    loss2 = jax.block_until_ready(
        softmax_cross_entropy_loss(x2, t2, tile_b=8, n_parts=2,
                                   min_split_rows=8))
    ref2 = _reference(x2, t2)
    assert jnp.allclose(loss2, ref2, rtol=1e-4, atol=1e-3), (loss2, ref2)

    # 3) Automatic tile selection with 2 partitions (lane-dense class axis).
    B3, C3 = 2048, 256
    x3 = jax.random.normal(k5, (B3, C3), dtype=jnp.float32)
    t3 = jax.nn.softmax(jax.random.normal(k6, (B3, C3), dtype=jnp.float32),
                        axis=1)
    loss3 = jax.block_until_ready(softmax_cross_entropy_loss(x3, t3))
    ref3 = _reference(x3, t3)
    assert jnp.allclose(loss3, ref3, rtol=1e-4, atol=1e-2), (loss3, ref3)

    print("KERNEL_OK")
</pallas_src>

<mosaic_0001>
module attributes {stable_mosaic.version = 11 : i64} {
  func.func @_xent_kernel(%arg0: i32, %arg1: i32, %arg2: memref<16x32xf32, #tpu.memory_space<vmem>>, %arg3: memref<16x32xf32, #tpu.memory_space<vmem>>, %arg4: memref<8x128xf32, #tpu.memory_space<vmem>>, %arg5: memref<8x128xf32, #tpu.memory_space<vmem>>) attributes {dimension_semantics = [#tpu.dimension_semantics<parallel>, #tpu.dimension_semantics<arbitrary>], iteration_bounds = array<i64: 1, 1>, scalar_prefetch = 0 : i64, scratch_operands = 1 : i64, tpu.core_type = #tpu.core_type<tc>, window_params = [{transform_indices = @transform_0, window_bounds = array<i64: 16, 32>}, {transform_indices = @transform_1, window_bounds = array<i64: 16, 32>}, {transform_indices = @transform_2, window_bounds = array<i64: 8, 128>}]} {
    %c0_i32 = arith.constant 0 : i32
    %0 = arith.cmpi eq, %arg1, %c0_i32 : i32
    %1 = arith.extui %0 : i1 to i32
    %c0_i32_0 = arith.constant 0 : i32
    %2 = arith.cmpi ne, %1, %c0_i32_0 : i32
    scf.if %2 {
      %cst_14 = arith.constant 0.000000e+00 : f32
      %32 = vector.broadcast %cst_14 : f32 to vector<8x128xf32>
      %c0_15 = arith.constant 0 : index
      %c0_16 = arith.constant 0 : index
      %33 = vector.load %arg5[%c0_15, %c0_16] : memref<8x128xf32, #tpu.memory_space<vmem>>, vector<8x128xf32>
      tpu.vector_store %arg5[%c0_15, %c0_16], %32 {strides = array<i32>} : memref<8x128xf32, #tpu.memory_space<vmem>>, vector<8x128xf32>,
    } else {
    }
    %c0 = arith.constant 0 : index
    %c0_1 = arith.constant 0 : index
    %3 = vector.load %arg2[%c0, %c0_1] : memref<16x32xf32, #tpu.memory_space<vmem>>, vector<16x32xf32>
    %c0_2 = arith.constant 0 : index
    %c0_3 = arith.constant 0 : index
    %4 = vector.load %arg3[%c0_2, %c0_3] : memref<16x32xf32, #tpu.memory_space<vmem>>, vector<16x32xf32>
    %cst = arith.constant dense<0xFF800000> : vector<16xf32>
    %5 = vector.multi_reduction <maximumf>, %3, %cst [1] : vector<16x32xf32> to vector<16xf32>
    %6 = vector.shape_cast %5 : vector<16xf32> to vector<16x1xf32>
    %7 = vector.broadcast %6 : vector<16x1xf32> to vector<16x32xf32>
    %8 = arith.subf %3, %7 : vector<16x32xf32>
    %9 = math.exp %8 : vector<16x32xf32>
    %cst_4 = arith.constant dense<0.000000e+00> : vector<16xf32>
    %10 = vector.multi_reduction <add>, %9, %cst_4 [1] : vector<16x32xf32> to vector<16xf32>
    %11 = vector.shape_cast %10 : vector<16xf32> to vector<16x1xf32>
    %12 = math.log %11 : vector<16x1xf32>
    %13 = arith.addf %6, %12 : vector<16x1xf32>
    %cst_5 = arith.constant dense<0.000000e+00> : vector<16xf32>
    %14 = vector.multi_reduction <add>, %4, %cst_5 [1] : vector<16x32xf32> to vector<16xf32>
    %15 = vector.shape_cast %14 : vector<16xf32> to vector<16x1xf32>
    %16 = arith.mulf %4, %3 : vector<16x32xf32>
    %cst_6 = arith.constant dense<0.000000e+00> : vector<16xf32>
    %17 = vector.multi_reduction <add>, %16, %cst_6 [1] : vector<16x32xf32> to vector<16xf32>
    %18 = vector.shape_cast %17 : vector<16xf32> to vector<16x1xf32>
    %c0_7 = arith.constant 0 : index
    %c0_8 = arith.constant 0 : index
    %19 = vector.load %arg5[%c0_7, %c0_8] : memref<8x128xf32, #tpu.memory_space<vmem>>, vector<8x128xf32>
    %20 = arith.mulf %13, %15 : vector<16x1xf32>
    %21 = arith.subf %20, %18 : vector<16x1xf32>
    %22 = vector.shape_cast %21 : vector<16x1xf32> to vector<1x16x1xf32>
    %cst_9 = arith.constant dense<0.000000e+00> : vector<1xf32>
    %23 = vector.multi_reduction <add>, %22, %cst_9 [1, 2] : vector<1x16x1xf32> to vector<1xf32>
    %24 = vector.shape_cast %23 : vector<1xf32> to vector<1x1x1xf32>
    %25 = vector.extract %24[0, 0, 0] : f32 from vector<1x1x1xf32>
    %26 = vector.broadcast %25 : f32 to vector<8x128xf32>
    %27 = arith.addf %19, %26 : vector<8x128xf32>
    %c0_10 = arith.constant 0 : index
    %c0_11 = arith.constant 0 : index
    %28 = vector.load %arg5[%c0_10, %c0_11] : memref<8x128xf32, #tpu.memory_space<vmem>>, vector<8x128xf32>
    tpu.vector_store %arg5[%c0_10, %c0_11], %27 {strides = array<i32>} : memref<8x128xf32, #tpu.memory_space<vmem>>, vector<8x128xf32>,
    %c0_i32_12 = arith.constant 0 : i32
    %29 = arith.cmpi eq, %arg1, %c0_i32_12 : i32
    %30 = arith.extui %29 : i1 to i32
    %c0_i32_13 = arith.constant 0 : i32
    %31 = arith.cmpi ne, %30, %c0_i32_13 : i32
    scf.if %31 {
      %c0_14 = arith.constant 0 : index
      %c0_15 = arith.constant 0 : index
      %32 = vector.load %arg5[%c0_14, %c0_15] : memref<8x128xf32, #tpu.memory_space<vmem>>, vector<8x128xf32>
      %c0_16 = arith.constant 0 : index
      %c0_17 = arith.constant 0 : index
      %33 = vector.load %arg4[%c0_16, %c0_17] : memref<8x128xf32, #tpu.memory_space<vmem>>, vector<8x128xf32>
      tpu.vector_store %arg4[%c0_16, %c0_17], %32 {strides = array<i32>} : memref<8x128xf32, #tpu.memory_space<vmem>>, vector<8x128xf32>,
    } else {
    }
    return
  }
  func.func @transform_0(%arg0: i32, %arg1: i32) -> (i32, i32) {
    %c1_i32 = arith.constant 1 : i32
    %0 = arith.muli %arg0, %c1_i32 : i32
    %1 = arith.addi %0, %arg1 : i32
    %c0_i32 = arith.constant 0 : i32
    %c0_i32_0 = arith.constant 0 : i32
    return %1, %c0_i32 : i32, i32
  }
  func.func @transform_1(%arg0: i32, %arg1: i32) -> (i32, i32) {
    %c1_i32 = arith.constant 1 : i32
    %0 = arith.muli %arg0, %c1_i32 : i32
    %1 = arith.addi %0, %arg1 : i32
    %c0_i32 = arith.constant 0 : i32
    %c0_i32_0 = arith.constant 0 : i32
    return %1, %c0_i32 : i32, i32
  }
  func.func @transform_2(%arg0: i32, %arg1: i32) -> (i32, i32) {
    %c0_i32 = arith.constant 0 : i32
    %c0_i32_0 = arith.constant 0 : i32
    return %arg0, %c0_i32 : i32, i32
  }
}

</mosaic_0001>

<llo_original>
// kernel: tpu_custom_call.1
$region0: #{tpu_custom_call.1}
  #allocation0 [shape = 'u32[]', space=smem, size = 0x4, offset = 0x4, fixed_abs, tag = 'smem constant byte address 0x4 - core index']
  #allocation1 [shape = 'u32[72,128]{1,0:T(1,128)}', space=vmem, size = 0x9000, scoped, tag = 'internal scratch']
  #allocation2 [shape = 'f32[8,128]{1,0:T(8,128)}', space=vmem, size = 0x1000, scoped, tag = 'scratch operand']
  %s0 = inlined_call_operand.hbm [shape: f32[16,32], index: 0, kind: input, shape index: {}]
  %s1 = inlined_call_operand.hbm [shape: f32[16,32], index: 1, kind: input, shape index: {}]
  %s2 = inlined_call_operand.hbm [shape: f32[8,128], index: 2, kind: output, shape index: {}]
  %s3 = sld [smem:[#allocation0]]
  $region34: #{tpu_custom_call.1} parent=0
    _
  %s5 = ssub.s32 1, %s3
  %s6 = scalar_select 0, %s5, %s3
  $region1: #{tpu_custom_call.1} parent=0
    #allocation3 [shape = 'u8[8192]{0}', space=vmem, size = 0x2000, scoped, tag = 'input window, operand 0, single buffered']
    #allocation4 [shape = 's32[1]{0}', space=sflag, size = 0x4, scoped, tag = 'scoped memory for tpu_custom_call.1']
    #allocation5 [shape = 's32[1]{0}', space=sflag, size = 0x4, scoped, tag = 'scoped memory for tpu_custom_call.1']
    #allocation6 [shape = 'u8[8192]{0}', space=vmem, size = 0x2000, scoped, tag = 'input window, operand 1, single buffered']
    #allocation7 [shape = 's32[1]{0}', space=sflag, size = 0x4, scoped, tag = 'scoped memory for tpu_custom_call.1']
    #allocation8 [shape = 'u8[4096]{0}', space=vmem, size = 0x1000, scoped, tag = 'output window, operand 0, single buffered']
    %7 = vsyncpa [#allocation4], 0
    %8 = vsyncpa [#allocation7], 0
    %9 = vsyncpa [#allocation5], 0
    // Predicated region
    $region2: #{tpu_custom_call.1} parent=1 // pred_check
      _
    $region3: #{tpu_custom_call.1} parent=1 // pred_check_branch
      %11 = sbr.rel (0) target = $region5
    $region4: #{tpu_custom_call.1} parent=1 // pred_region
      %s12 = sadd.s32 0, 0
      %s13 = smul.u32 2, %s12
      %15 = vsyncadd [#allocation4], 0
      %s16 = smul.addr %s13, 8
      %s17 = scalar_lea.hbm %s0, %s16
      %s18 = sshll.u32 %s17, 4
      %s19 = int_to_ptr.hbm [resolvable:$true] %s18
      %s20 = sshll.u32 [#allocation3], 4
      %s21 = int_to_ptr.vmem [resolvable:$true] %s20
      %26 = dma.hbm_to_vmem [thread:$0]  %s19, 256, %s21, [#allocation4], 128, 128, 8
    $region5: #{tpu_custom_call.1} parent=1 // pred_fallthru
      _
    // Predicated region
    $region6: #{tpu_custom_call.1} parent=1 // pred_check
      _
    $region7: #{tpu_custom_call.1} parent=1 // pred_check_branch
      %28 = sbr.rel (0) target = $region9
    $region8: #{tpu_custom_call.1} parent=1 // pred_region
      %s29 = sadd.s32 0, 0
      %s30 = smul.u32 2, %s29
      %32 = vsyncadd [#allocation7], 0
      %s33 = smul.addr %s30, 8
      %s34 = scalar_lea.hbm %s1, %s33
      %s35 = sshll.u32 %s34, 4
      %s36 = int_to_ptr.hbm [resolvable:$true] %s35
      %s37 = sshll.u32 [#allocation6], 4
      %s38 = int_to_ptr.vmem [resolvable:$true] %s37
      %43 = dma.hbm_to_vmem [thread:$0]  %s36, 256, %s38, [#allocation7], 128, 128, 8
    $region9: #{tpu_custom_call.1} parent=1 // pred_fallthru
      _
    // Predicated region
    $region10: #{tpu_custom_call.1} parent=1 // pred_check
      _
    $region11: #{tpu_custom_call.1} parent=1 // pred_check_branch
      %45 = sbr.rel (0) target = $region13
    $region12: #{tpu_custom_call.1} parent=1 // pred_region
      %47 = dma.done [#allocation4], 256
    $region13: #{tpu_custom_call.1} parent=1 // pred_fallthru
      _
    // Predicated region
    $region14: #{tpu_custom_call.1} parent=1 // pred_check
      _
    $region15: #{tpu_custom_call.1} parent=1 // pred_check_branch
      %49 = sbr.rel (0) target = $region17
    $region16: #{tpu_custom_call.1} parent=1 // pred_region
      %51 = dma.done [#allocation7], 256
    $region17: #{tpu_custom_call.1} parent=1 // pred_fallthru
      _
    %s52 = sadd.s32 0, 0
    %s53 = smul.u32 2, %s52
    %s54 = sadd.s32 0, 0
    %s55 = smul.u32 2, %s54
    %p56 = scmp.eq.s32.totalorder 0, 0
    // Predicated region
    $region18: #{tpu_custom_call.1} parent=1 // pred_check
      %p57 = pneg %p56
    $region19: #{tpu_custom_call.1} parent=1 // pred_check_branch
      %59 = sbr.rel (%p57) target = $region21
    $region20: #{tpu_custom_call.1} parent=1 // pred_region
      %60 = vst [vmem:[#allocation2] sm:$0xff] 0.0
    $region21: #{tpu_custom_call.1} parent=1 // pred_fallthru
      _
    %v61 = vld [vmem:[#allocation3] sm:$0xff]
    %v62 = vld [vmem:[#allocation3 + $0x8] sm:$0xff]
    %v63 = vld [vmem:[#allocation6] sm:$0xff]
    %v64 = vld [vmem:[#allocation6 + $0x8] sm:$0xff]
    %vm65 = vcmask 261120
    %v66 = vsel %vm65, %v61, -inf
    %67 = vmax.xlane.f32.xlu0 %v66
    %v68 = vpop.xlane.xlu0 %67
    %v69 = vsel %vm65, %v62, -inf
    %70 = vmax.xlane.f32.xlu0 %v69
    %v71 = vpop.xlane.xlu0 %70
    %v72 = vsub.f32 %v61, %v68
    %v73 = vsub.f32 %v62, %v71
    %v74 = vmul.f32 %v72, 1.442695
    %v75 = vpow.pop %v74
    %v76 = vmul.f32 %v73, 1.442695
    %v77 = vpow.pop %v76
    %v78 = vsel %vm65, %v75, 0.0
    %79 = vadd.xlane.f32.xlu0 %v78
    %v80 = vpop.xlane.xlu0 %79
    %v81 = vsel %vm65, %v77, 0.0
    %82 = vadd.xlane.f32.xlu0 %v81
    %v83 = vpop.xlane.xlu0 %82
    %v84 = vlog2.pop %v80
    %v85 = vmul.f32 %v84, 0.6931472
    %v86 = vlog2.pop %v83
    %v87 = vmul.f32 %v86, 0.6931472
    %v88 = vadd.f32 %v68, %v85
    %v89 = vadd.f32 %v71, %v87
    %v90 = vsel %vm65, %v63, 0.0
    %91 = vadd.xlane.f32.xlu0 %v90
    %v92 = vpop.xlane.xlu0 %91
    %v93 = vsel %vm65, %v64, 0.0
    %94 = vadd.xlane.f32.xlu0 %v93
    %v95 = vpop.xlane.xlu0 %94
    %v96 = vmul.f32 %v63, %v61
    %v97 = vmul.f32 %v64, %v62
    %v98 = vsel %vm65, %v96, 0.0
    %99 = vadd.xlane.f32.xlu0 %v98
    %v100 = vpop.xlane.xlu0 %99
    %v101 = vsel %vm65, %v97, 0.0
    %102 = vadd.xlane.f32.xlu0 %v101
    %v103 = vpop.xlane.xlu0 %102
    %v104 = vld [vmem:[#allocation2] sm:$0xff]
    %v105 = vmul.f32 %v88, %v92
    %v106 = vmul.f32 %v89, %v95
    %v107 = vsub.f32 %v105, %v100
    %v108 = vsub.f32 %v106, %v103
    %vm109 = vcmask 7168
    %v110 = vsel %vm109, %v107, 0.0
    %v111 = vsel %vm109, %v108, 0.0
    %v112 = vadd.f32 %v110, %v111
    %113 = vadd.xlane.f32.xlu0 %v112
    %v114 = vpop.xlane.xlu0 %113
    %v115 = vrot.slane %v114, 4
    %v116 = vadd.f32 %v114, %v115
    %v117 = vrot.slane %v116, 2
    %v118 = vadd.f32 %v116, %v117
    %v119 = vrot.slane %v118, 1
    %v120 = vadd.f32 %v118, %v119
    %s121 = vtos %v120
    %v122 = vstv %s121
    %v123 = vadd.f32 %v104, %v122
    %124 = vst [vmem:[#allocation2] sm:$0xff] %v123
    // Predicated region
    $region22: #{tpu_custom_call.1} parent=1 // pred_check
      %p125 = pneg %p56
    $region23: #{tpu_custom_call.1} parent=1 // pred_check_branch
      %127 = sbr.rel (%p125) target = $region25
    $region24: #{tpu_custom_call.1} parent=1 // pred_region
      %v128 = vld [vmem:[#allocation2] sm:$0xff]
      %129 = vst [vmem:[#allocation8] sm:$0xff] %v128
    $region25: #{tpu_custom_call.1} parent=1 // pred_fallthru
      _
    // Predicated region
    $region26: #{tpu_custom_call.1} parent=1 // pred_check
      _
    $region27: #{tpu_custom_call.1} parent=1 // pred_check_branch
      %131 = sbr.rel (0) target = $region29
    $region28: #{tpu_custom_call.1} parent=1 // pred_region
      %133 = vsyncadd [#allocation5], 0
      %s135 = sshll.u32 [#allocation8], 4
      %s136 = int_to_ptr.vmem [resolvable:$true] %s135
      %s137 = sshll.u32 %s2, 4
      %s138 = int_to_ptr.hbm [resolvable:$true] %s137
      %140 = dma.vmem_to_hbm [thread:$0]  %s136, 128, %s138, [#allocation5]
    $region29: #{tpu_custom_call.1} parent=1 // pred_fallthru
      _
    // Predicated region
    $region30: #{tpu_custom_call.1} parent=1 // pred_check
      _
    $region31: #{tpu_custom_call.1} parent=1 // pred_check_branch
      %142 = sbr.rel (0) target = $region33
    $region32: #{tpu_custom_call.1} parent=1 // pred_region
      %144 = dma.done [#allocation5], 128
    $region33: #{tpu_custom_call.1} parent=1 // pred_fallthru
      _
    %145 = vsyncpa [#allocation4], 1
    %146 = vsyncpa [#allocation7], 1
    %147 = vsyncpa [#allocation5], 1

</llo_original>
